<compile_context>
chip_gen: v5e
topology: v5e:2x2
jax: 0.10.0
libtpu: 0.0.40
codegen_flags: <defaults>
</compile_context>

<pallas_src>
import jax
import jax.numpy as jnp
from jax.experimental import pallas as pl
from jax.experimental.pallas import tpu as pltpu


def _complex_diag_kernel(real_ref, imag_ref, x_ref, o_ref):
    # real_ref/imag_ref: (1, half); x_ref/o_ref: (tm, dim) with dim == 2*half.
    half = real_ref.shape[-1]
    x = x_ref[...]
    xr = x[:, :half]          # real part of the embeddings
    xi = x[:, half:]          # imaginary part of the embeddings
    rb = real_ref[...]        # (1, half), broadcast over rows
    ib = imag_ref[...]
    # Pure VPU elementwise work: 4 muls, 1 add, 1 sub per element-pair.
    o_ref[:, :half] = xr * rb - xi * ib
    o_ref[:, half:] = xr * ib + xi * rb


def _choose_tm(n_rows: int, dim: int, itemsize: int) -> int:
    """Pick a row-tile: ~2 MiB per tile, multiple of 8, not far past n_rows."""
    target_tile_bytes = 2 * 1024 * 1024
    tm = target_tile_bytes // max(1, dim * itemsize)
    tm = max(8, min(1024, (tm // 8) * 8))
    rows_rounded_up = ((n_rows + 7) // 8) * 8
    return min(tm, rows_rounded_up)


def complex_diagonal_operator(embeddings: jax.Array,
                              real: jax.Array,
                              imag: jax.Array) -> jax.Array:
    """y = complex-diagonal(real + i*imag) applied along the last axis."""
    dim = embeddings.shape[-1]
    if dim % 2 != 0:
        raise ValueError("Need even dimension (real half + imaginary half)")
    half = dim // 2
    assert real.shape == (half,) and imag.shape == (half,)

    orig_shape = embeddings.shape
    x2d = embeddings.reshape(-1, dim)            # metadata-only reshape
    n_rows = x2d.shape[0]

    tm = _choose_tm(n_rows, dim, x2d.dtype.itemsize)
    grid = (pl.cdiv(n_rows, tm),)                # ragged last block handled by Pallas

    real2d = real.reshape(1, half).astype(x2d.dtype)
    imag2d = imag.reshape(1, half).astype(x2d.dtype)

    out = pl.pallas_call(
        _complex_diag_kernel,
        out_shape=jax.ShapeDtypeStruct((n_rows, dim), x2d.dtype),
        grid_spec=pltpu.PrefetchScalarGridSpec(
            num_scalar_prefetch=0,
            grid=grid,
            in_specs=[
                pl.BlockSpec((1, half), lambda i: (0, 0)),   # real params (resident)
                pl.BlockSpec((1, half), lambda i: (0, 0)),   # imag params (resident)
                pl.BlockSpec((tm, dim), lambda i: (i, 0)),   # embeddings row tile
            ],
            out_specs=pl.BlockSpec((tm, dim), lambda i: (i, 0)),
        ),
        compiler_params=pltpu.CompilerParams(
            dimension_semantics=("parallel",),
        ),
    )(real2d, imag2d, x2d)

    return out.reshape(orig_shape)


if __name__ == "__main__":
    key = jax.random.PRNGKey(0)
    k_x, k_r, k_i = jax.random.split(key, 3)

    dim = 32                     # even: 16 real + 16 imaginary coordinates
    batch, seq = 2, 8
    x = jax.random.normal(k_x, (batch, seq, dim), dtype=jnp.float32)

    # Module __init__ uses real=ones, imag=zeros (identity); use deterministic
    # non-trivial values so the complex multiply is actually exercised.
    real = 1.0 + 0.1 * jax.random.normal(k_r, (dim // 2,), dtype=jnp.float32)
    imag = 0.1 * jax.random.normal(k_i, (dim // 2,), dtype=jnp.float32)

    y = complex_diagonal_operator(x, real, imag)
    y = jax.block_until_ready(y)

    # Reference (plain JAX) check.
    half = dim // 2
    xr, xi = x[..., :half], x[..., half:]
    ref = jnp.concatenate([xr * real - xi * imag, xr * imag + xi * real], axis=-1)

    assert y.shape == x.shape and y.dtype == x.dtype
    assert jnp.allclose(y, ref, atol=1e-6, rtol=1e-6)

    print("KERNEL_OK")
</pallas_src>

<mosaic_0001>
module attributes {stable_mosaic.version = 11 : i64} {
  func.func @_complex_diag_kernel(%arg0: i32, %arg1: memref<1x16xf32, #tpu.memory_space<vmem>>, %arg2: memref<1x16xf32, #tpu.memory_space<vmem>>, %arg3: memref<16x32xf32, #tpu.memory_space<vmem>>, %arg4: memref<16x32xf32, #tpu.memory_space<vmem>>) attributes {dimension_semantics = [#tpu.dimension_semantics<parallel>], iteration_bounds = array<i64: 1>, scalar_prefetch = 0 : i64, scratch_operands = 0 : i64, tpu.core_type = #tpu.core_type<tc>, window_params = [{pipeline_mode = #tpu.pipeline_mode<synchronous>, transform_indices = @transform_0, window_bounds = array<i64: 1, 16>}, {pipeline_mode = #tpu.pipeline_mode<synchronous>, transform_indices = @transform_1, window_bounds = array<i64: 1, 16>}, {transform_indices = @transform_2, window_bounds = array<i64: 16, 32>}, {transform_indices = @transform_3, window_bounds = array<i64: 16, 32>}]} {
    %c0 = arith.constant 0 : index
    %c0_0 = arith.constant 0 : index
    %0 = vector.load %arg3[%c0, %c0_0] : memref<16x32xf32, #tpu.memory_space<vmem>>, vector<16x32xf32>
    %1 = vector.extract_strided_slice %0 {offsets = [0, 0], sizes = [16, 16], strides = [1, 1]} : vector<16x32xf32> to vector<16x16xf32>
    %2 = vector.extract_strided_slice %0 {offsets = [0, 16], sizes = [16, 16], strides = [1, 1]} : vector<16x32xf32> to vector<16x16xf32>
    %c0_1 = arith.constant 0 : index
    %c0_2 = arith.constant 0 : index
    %3 = vector.load %arg1[%c0_1, %c0_2] : memref<1x16xf32, #tpu.memory_space<vmem>>, vector<1x16xf32>
    %c0_3 = arith.constant 0 : index
    %c0_4 = arith.constant 0 : index
    %4 = vector.load %arg2[%c0_3, %c0_4] : memref<1x16xf32, #tpu.memory_space<vmem>>, vector<1x16xf32>
    %5 = vector.broadcast %3 : vector<1x16xf32> to vector<16x16xf32>
    %6 = arith.mulf %1, %5 : vector<16x16xf32>
    %7 = vector.broadcast %4 : vector<1x16xf32> to vector<16x16xf32>
    %8 = arith.mulf %2, %7 : vector<16x16xf32>
    %9 = arith.subf %6, %8 : vector<16x16xf32>
    %c0_5 = arith.constant 0 : index
    %c0_6 = arith.constant 0 : index
    %10 = vector.load %arg4[%c0_5, %c0_6] : memref<16x32xf32, #tpu.memory_space<vmem>>, vector<16x16xf32>
    tpu.vector_store %arg4[%c0_5, %c0_6], %9 {strides = array<i32>} : memref<16x32xf32, #tpu.memory_space<vmem>>, vector<16x16xf32>,
    %11 = vector.broadcast %4 : vector<1x16xf32> to vector<16x16xf32>
    %12 = arith.mulf %1, %11 : vector<16x16xf32>
    %13 = vector.broadcast %3 : vector<1x16xf32> to vector<16x16xf32>
    %14 = arith.mulf %2, %13 : vector<16x16xf32>
    %15 = arith.addf %12, %14 : vector<16x16xf32>
    %c0_7 = arith.constant 0 : index
    %c16 = arith.constant 16 : index
    %16 = vector.load %arg4[%c0_7, %c16] : memref<16x32xf32, #tpu.memory_space<vmem>>, vector<16x16xf32>
    tpu.vector_store %arg4[%c0_7, %c16], %15 {strides = array<i32>} : memref<16x32xf32, #tpu.memory_space<vmem>>, vector<16x16xf32>,
    return
  }
  func.func @transform_0(%arg0: i32) -> (i32, i32) {
    %c0_i32 = arith.constant 0 : i32
    %c0_i32_0 = arith.constant 0 : i32
    %c0_i32_1 = arith.constant 0 : i32
    return %c0_i32, %c0_i32_0 : i32, i32
  }
  func.func @transform_1(%arg0: i32) -> (i32, i32) {
    %c0_i32 = arith.constant 0 : i32
    %c0_i32_0 = arith.constant 0 : i32
    %c0_i32_1 = arith.constant 0 : i32
    return %c0_i32, %c0_i32_0 : i32, i32
  }
  func.func @transform_2(%arg0: i32) -> (i32, i32) {
    %c0_i32 = arith.constant 0 : i32
    %c0_i32_0 = arith.constant 0 : i32
    return %arg0, %c0_i32 : i32, i32
  }
  func.func @transform_3(%arg0: i32) -> (i32, i32) {
    %c0_i32 = arith.constant 0 : i32
    %c0_i32_0 = arith.constant 0 : i32
    return %arg0, %c0_i32 : i32, i32
  }
}

</mosaic_0001>

<llo_original>
// kernel: tpu_custom_call.1
$region0: #{tpu_custom_call.1}
  #allocation0 [shape = 'u32[]', space=smem, size = 0x4, offset = 0x4, fixed_abs, tag = 'smem constant byte address 0x4 - core index']
  #allocation1 [shape = 'u32[72,128]{1,0:T(1,128)}', space=vmem, size = 0x9000, scoped, tag = 'internal scratch']
  %s0 = inlined_call_operand.hbm [shape: f32[1,16], index: 0, kind: input, shape index: {}]
  %s1 = inlined_call_operand.hbm [shape: f32[1,16], index: 1, kind: input, shape index: {}]
  %s2 = inlined_call_operand.hbm [shape: f32[16,32], index: 2, kind: input, shape index: {}]
  %s3 = inlined_call_operand.hbm [shape: f32[16,32], index: 3, kind: output, shape index: {}]
  %s4 = sld [smem:[#allocation0]]
  $region34: #{tpu_custom_call.1} parent=0
    _
  %s6 = ssub.s32 1, %s4
  %s7 = scalar_select 0, %s6, %s4
  $region1: #{tpu_custom_call.1} parent=0
    #allocation2 [shape = 'u8[512]{0}', space=vmem, size = 0x400, scoped, tag = 'input window, operand 0, single buffered']
    #allocation3 [shape = 's32[1]{0}', space=sflag, size = 0x4, scoped, tag = 'scoped memory for tpu_custom_call.1']
    #allocation4 [shape = 's32[1]{0}', space=sflag, size = 0x4, scoped, tag = 'scoped memory for tpu_custom_call.1']
    #allocation5 [shape = 'u8[512]{0}', space=vmem, size = 0x400, scoped, tag = 'input window, operand 1, single buffered']
    #allocation6 [shape = 's32[1]{0}', space=sflag, size = 0x4, scoped, tag = 'scoped memory for tpu_custom_call.1']
    #allocation7 [shape = 'u8[8192]{0}', space=vmem, size = 0x2000, scoped, tag = 'input window, operand 2, single buffered']
    #allocation8 [shape = 'u8[8192]{0}', space=vmem, size = 0x2000, scoped, tag = 'output window, operand 0, single buffered']
    %8 = vsyncpa [#allocation3], 0
    %9 = vsyncpa [#allocation6], 0
    %10 = vsyncpa [#allocation4], 0
    // Predicated region
    $region2: #{tpu_custom_call.1} parent=1 // pred_check
      _
    $region3: #{tpu_custom_call.1} parent=1 // pred_check_branch
      %12 = sbr.rel (0) target = $region5
    $region4: #{tpu_custom_call.1} parent=1 // pred_region
      %14 = vsyncadd [#allocation3], 0
      %s16 = sshll.u32 %s0, 4
      %s17 = int_to_ptr.hbm [resolvable:$true] %s16
      %s18 = sshll.u32 [#allocation2], 4
      %s19 = int_to_ptr.vmem [resolvable:$true] %s18
      %21 = dma.hbm_to_vmem [thread:$0]  %s17, 16, %s19, [#allocation3]
    $region5: #{tpu_custom_call.1} parent=1 // pred_fallthru
      _
    // Predicated region
    $region6: #{tpu_custom_call.1} parent=1 // pred_check
      _
    $region7: #{tpu_custom_call.1} parent=1 // pred_check_branch
      %23 = sbr.rel (0) target = $region9
    $region8: #{tpu_custom_call.1} parent=1 // pred_region
      %25 = vsyncadd [#allocation6], 0
      %s27 = sshll.u32 %s1, 4
      %s28 = int_to_ptr.hbm [resolvable:$true] %s27
      %s29 = sshll.u32 [#allocation5], 4
      %s30 = int_to_ptr.vmem [resolvable:$true] %s29
      %32 = dma.hbm_to_vmem [thread:$0]  %s28, 16, %s30, [#allocation6]
    $region9: #{tpu_custom_call.1} parent=1 // pred_fallthru
      _
    // Predicated region
    $region10: #{tpu_custom_call.1} parent=1 // pred_check
      _
    $region11: #{tpu_custom_call.1} parent=1 // pred_check_branch
      %34 = sbr.rel (0) target = $region13
    $region12: #{tpu_custom_call.1} parent=1 // pred_region
      %36 = vsyncadd [#allocation6], 0
      %s37 = sshll.u32 %s2, 4
      %s38 = int_to_ptr.hbm [resolvable:$true] %s37
      %s39 = sshll.u32 [#allocation7], 4
      %s40 = int_to_ptr.vmem [resolvable:$true] %s39
      %45 = dma.hbm_to_vmem [thread:$0]  %s38, 256, %s40, [#allocation6], 128, 128, 8
    $region13: #{tpu_custom_call.1} parent=1 // pred_fallthru
      _
    // Predicated region
    $region14: #{tpu_custom_call.1} parent=1 // pred_check
      _
    $region15: #{tpu_custom_call.1} parent=1 // pred_check_branch
      %47 = sbr.rel (0) target = $region17
    $region16: #{tpu_custom_call.1} parent=1 // pred_region
      %49 = dma.done [#allocation3], 16
    $region17: #{tpu_custom_call.1} parent=1 // pred_fallthru
      _
    // Predicated region
    $region18: #{tpu_custom_call.1} parent=1 // pred_check
      _
    $region19: #{tpu_custom_call.1} parent=1 // pred_check_branch
      %51 = sbr.rel (0) target = $region21
    $region20: #{tpu_custom_call.1} parent=1 // pred_region
      %53 = dma.done [#allocation6], 16
    $region21: #{tpu_custom_call.1} parent=1 // pred_fallthru
      _
    // Predicated region
    $region22: #{tpu_custom_call.1} parent=1 // pred_check
      _
    $region23: #{tpu_custom_call.1} parent=1 // pred_check_branch
      %55 = sbr.rel (0) target = $region25
    $region24: #{tpu_custom_call.1} parent=1 // pred_region
      %57 = dma.done [#allocation6], 256
    $region25: #{tpu_custom_call.1} parent=1 // pred_fallthru
      _
    %v58 = vld [vmem:[#allocation7] sm:$0xff]
    %v59 = vld [vmem:[#allocation7 + $0x8] sm:$0xff]
    %v60 = vld [vmem:[#allocation2] sm:$0x1]
    %v61 = vld [vmem:[#allocation5] sm:$0x1]
    %v63 = vperm.slane %v60, 0
    %v65 = vmul.f32 %v58, %v63
    %v66 = vmul.f32 %v59, %v63
    %v68 = vperm.slane %v61, 0
    %70 = vrot.lane.b32.xlu0 %v68, 16
    %v71 = vpop.permute.xlu0 %70
    %v73 = vmul.f32 %v58, %v71
    %v74 = vmul.f32 %v59, %v71
    %77 = vrot.lane.b32.xlu0 %v73, 112
    %v78 = vpop.permute.xlu0 %77
    %79 = vrot.lane.b32.xlu0 %v74, 112
    %v80 = vpop.permute.xlu0 %79
    %v83 = vsub.f32 %v65, %v78
    %v84 = vsub.f32 %v66, %v80
    %vm85 = vcmask 130048
    %86 = vst.msk [vmem:[#allocation8] sm:$0xff] %vm85, %v83
    %87 = vst.msk [vmem:[#allocation8 + $0x8] sm:$0xff] %vm85, %v84
    %v88 = vmul.f32 %v58, %v68
    %v89 = vmul.f32 %v59, %v68
    %90 = vrot.lane.b32.xlu0 %v63, 16
    %v91 = vpop.permute.xlu0 %90
    %v93 = vmul.f32 %v58, %v91
    %v94 = vmul.f32 %v59, %v91
    %97 = vrot.lane.b32.xlu0 %v93, 112
    %v98 = vpop.permute.xlu0 %97
    %99 = vrot.lane.b32.xlu0 %v94, 112
    %v100 = vpop.permute.xlu0 %99
    %v103 = vadd.f32 %v88, %v98
    %v104 = vadd.f32 %v89, %v100
    %107 = vrot.lane.b32.xlu0 %v103, 16
    %v108 = vpop.permute.xlu0 %107
    %109 = vrot.lane.b32.xlu0 %v104, 16
    %v110 = vpop.permute.xlu0 %109
    %vm113 = vcmask 261248
    %114 = vst.msk [vmem:[#allocation8] sm:$0xff] %vm113, %v108
    %115 = vst.msk [vmem:[#allocation8 + $0x8] sm:$0xff] %vm113, %v110
    // Predicated region
    $region26: #{tpu_custom_call.1} parent=1 // pred_check
      _
    $region27: #{tpu_custom_call.1} parent=1 // pred_check_branch
      %117 = sbr.rel (0) target = $region29
    $region28: #{tpu_custom_call.1} parent=1 // pred_region
      %119 = vsyncadd [#allocation4], 0
      %s120 = sshll.u32 [#allocation8], 4
      %s121 = int_to_ptr.vmem [resolvable:$true] %s120
      %s122 = sshll.u32 %s3, 4
      %s123 = int_to_ptr.hbm [resolvable:$true] %s122
      %128 = dma.vmem_to_hbm [thread:$0]  %s121, 256, %s123, [#allocation4], 128, 128, 8
    $region29: #{tpu_custom_call.1} parent=1 // pred_fallthru
      _
    // Predicated region
    $region30: #{tpu_custom_call.1} parent=1 // pred_check
      _
    $region31: #{tpu_custom_call.1} parent=1 // pred_check_branch
      %130 = sbr.rel (0) target = $region33
    $region32: #{tpu_custom_call.1} parent=1 // pred_region
      %132 = dma.done [#allocation4], 256
    $region33: #{tpu_custom_call.1} parent=1 // pred_fallthru
      _
    %133 = vsyncpa [#allocation3], 1
    %134 = vsyncpa [#allocation6], 1
    %135 = vsyncpa [#allocation4], 1

</llo_original>
